<compile_context>
chip_gen: v7x
topology: tpu7x:2x2x1
jax: 0.10.0
libtpu: 0.0.40
codegen_flags: <defaults>
</compile_context>

<pallas_src>
import functools

import jax
import jax.numpy as jnp
from jax.experimental import pallas as pl
from jax.experimental.pallas import tpu as pltpu


def _round_up(x, m):
    return (x + m - 1) // m * m


# ---------------------------------------------------------------------------
# Kernels
# ---------------------------------------------------------------------------
def mlp_kernel_resident(x_ref, w1_ref, b1_ref, w2_ref, b2_ref, o_ref, *,
                        bf16_act):
    """grid = (batch tiles,). W1/W2 fully VMEM-resident (constant index maps)."""
    h = jnp.dot(x_ref[...], w1_ref[...], preferred_element_type=jnp.float32)
    h = h + b1_ref[...]                       # bias add in f32
    if bf16_act:                              # v6e/v7x: bf16 EUP ~2x f32 tanh
        h = jnp.tanh(h.astype(jnp.bfloat16))
    else:                                     # v5e / f32 path
        h = jnp.tanh(h)
    y = jnp.dot(h.astype(w2_ref.dtype), w2_ref[...],
                preferred_element_type=jnp.float32)
    o_ref[...] = (y + b2_ref[...]).astype(o_ref.dtype)


def mlp_kernel_tiled_nout(x_ref, w1_ref, b1_ref, w2_ref, b2_ref, o_ref,
                          h_ref, *, bf16_act):
    """grid = (batch tiles, n_out tiles).

    Hidden activations are computed once per batch tile (at j == 0), cached in
    VMEM scratch and reused across the n_out tiles, so W2 never has to be
    fully resident (keeps big layers inside v7x's 64 MiB VMEM).
    """
    @pl.when(pl.program_id(1) == 0)
    def _():
        h = jnp.dot(x_ref[...], w1_ref[...], preferred_element_type=jnp.float32)
        h = h + b1_ref[...]
        if bf16_act:
            h = jnp.tanh(h.astype(jnp.bfloat16))
        else:
            h = jnp.tanh(h)
        h_ref[...] = h.astype(h_ref.dtype)

    y = jnp.dot(h_ref[...], w2_ref[...], preferred_element_type=jnp.float32)
    o_ref[...] = (y + b2_ref[...]).astype(o_ref.dtype)


# ---------------------------------------------------------------------------
# Probe: is pipeline_mode=pl.Buffered(1) (single-buffered constant operands)
# supported by this jax/libtpu?  Falls back to default double-buffering if not.
# ---------------------------------------------------------------------------
@functools.lru_cache(maxsize=None)
def _single_buffer_supported():
    def _copy(x_ref, o_ref):
        o_ref[...] = x_ref[...]
    try:
        spec = pl.BlockSpec((8, 128), lambda i: (0, 0),
                            pipeline_mode=pl.Buffered(1))
        f = pl.pallas_call(
            _copy,
            out_shape=jax.ShapeDtypeStruct((8, 128), jnp.float32),
            grid=(1,),
            in_specs=[spec],
            out_specs=pl.BlockSpec((8, 128), lambda i: (0, 0)),
        )
        x = jnp.arange(8 * 128, dtype=jnp.float32).reshape(8, 128)
        y = jax.block_until_ready(f(x))
        return bool(jnp.allclose(y, x))
    except Exception:
        return False


# ---------------------------------------------------------------------------
# One-time parameter preparation (hoisted out of the per-call path)
# ---------------------------------------------------------------------------
def _feat_pad(dim, compute_dtype):
    # Lane-dense 128 alignment; 256 on the bf16 path (v6e/v7x 256x256 MXU)
    # unless that would blow up a tiny dim (e.g. n_out=4).
    if jnp.dtype(compute_dtype) == jnp.dtype(jnp.bfloat16) and dim > 128:
        return _round_up(dim, 256)
    return _round_up(dim, 128)


def prepare_params(w1, b1, w2, b2, *, compute_dtype=jnp.float32):
    """Pad + cast the weights ONCE.

    w1: (n_in, n_hidden)  (transposed vs. torch's (n_hidden, n_in))
    b1: (n_hidden,) or (1, n_hidden)
    w2: (n_hidden, n_out)
    b2: (n_out,) or (1, n_out)

    Zero padding is mathematically exact: tanh(0)=0 and padded W2 rows/cols
    are zero.  Returns ((w1p, b1p, w2p, b2p), n_out).
    """
    n_in, n_hidden = w1.shape
    n_out = w2.shape[1]
    # Pad n_in only when it is big enough that lane-sparse x rows would hurt;
    # tiny n_in (e.g. 16) stays unpadded to avoid multiplying x HBM traffic.
    n_in_p = _round_up(n_in, 128) if n_in >= 64 else n_in
    nh_p = _feat_pad(n_hidden, compute_dtype)
    no_p = _feat_pad(n_out, compute_dtype)

    w1p = jnp.zeros((n_in_p, nh_p), compute_dtype).at[:n_in, :n_hidden].set(
        w1.astype(compute_dtype))
    b1p = jnp.zeros((1, nh_p), jnp.float32).at[0, :n_hidden].set(
        jnp.reshape(b1, (-1,)).astype(jnp.float32))
    w2p = jnp.zeros((nh_p, no_p), compute_dtype).at[:n_hidden, :n_out].set(
        w2.astype(compute_dtype))
    b2p = jnp.zeros((1, no_p), jnp.float32).at[0, :n_out].set(
        jnp.reshape(b2, (-1,)).astype(jnp.float32))
    return (w1p, b1p, w2p, b2p), n_out


# ---------------------------------------------------------------------------
# Forward pass
# ---------------------------------------------------------------------------
@functools.partial(
    jax.jit,
    static_argnames=("n_out", "block_b", "block_n", "out_dtype",
                     "activation_dtype"))
def net_forward(x, w1p, b1p, w2p, b2p, *, n_out, block_b=None, block_n=None,
                out_dtype=jnp.float32, activation_dtype=None):
    """Pallas implementation of Net.forward: w2(tanh(w1(x))).

    x: (B, n_in);  w1p/b1p/w2p/b2p: outputs of prepare_params().
    Returns (B, n_out) in out_dtype.
    """
    B, n_in = x.shape
    n_in_p, nh_p = w1p.shape
    no_p = w2p.shape[1]
    compute_dtype = w1p.dtype
    itemsize = jnp.dtype(compute_dtype).itemsize
    out_itemsize = jnp.dtype(out_dtype).itemsize

    # ---- chip-dependent (trace-time) defaults: perf only, never correctness.
    kind = jax.devices()[0].device_kind.lower()
    is_v5 = "v5" in kind
    is_v7 = ("v7" in kind) or ("7x" in kind)
    if block_b is None:
        block_b = 512 if is_v7 else 1024     # v7x: 64 MiB VMEM vs 128 MiB
    if activation_dtype is None:
        bf16_act = (jnp.dtype(compute_dtype) == jnp.dtype(jnp.bfloat16)
                    and not is_v5)           # v5e has no bf16 EUP/VPU
    else:
        bf16_act = jnp.dtype(activation_dtype) == jnp.dtype(jnp.bfloat16)

    # ---- batch tiling: aim for >= 2 grid steps so both v7x TCs get work.
    tb = _round_up(pl.cdiv(B, 2), 16)        # 16 covers f32 & bf16 packing
    tb = max(16, min(tb, block_b))

    single_buf = _single_buffer_supported()

    # ---- explicit VMEM budget (default scoped limit is 32 MiB on v6e/v7x).
    VMEM_BUDGET = 28 * 1024 * 1024

    def vmem_bytes(tb_, tn_, tiled):
        w_buf = 1 if single_buf else 2
        w2_buf = 2 if tiled else w_buf       # W2/b2 stream along j when tiled
        resident = w_buf * (n_in_p * nh_p * itemsize + nh_p * 4)
        resident += w2_buf * (nh_p * tn_ * itemsize + tn_ * 4)
        streams = 2 * tb_ * n_in_p * itemsize + 2 * tb_ * tn_ * out_itemsize
        scratch = tb_ * nh_p * itemsize if tiled else 0
        interm = tb_ * nh_p * 4              # f32 pre-activations
        return resident + streams + scratch + interm

    # ---- n_out tiling (scalability path) if the resident W2 doesn't fit.
    if block_n is not None:
        tn = min(_round_up(block_n, 128), no_p)
        while no_p % tn:
            tn -= 128
    else:
        tn = no_p
        if vmem_bytes(tb, tn, tiled=False) > VMEM_BUDGET:
            divisors = [d for d in range(128, no_p, 128) if no_p % d == 0]
            chosen = None
            for d in sorted(divisors, reverse=True):
                if vmem_bytes(tb, d, tiled=True) <= VMEM_BUDGET:
                    chosen = d
                    break
            if chosen is None and divisors:
                chosen = divisors[0]         # smallest tile; shrink tb below
            if chosen is not None:
                tn = chosen
    tiled = tn < no_p
    while vmem_bytes(tb, tn, tiled) > VMEM_BUDGET and tb > 16:
        tb = max(16, _round_up(tb // 2, 16))

    b_p = _round_up(B, tb)
    grid_b = b_p // tb
    grid_n = no_p // tn

    # ---- pad x only when actually needed (skip a full HBM round-trip).
    if (b_p != B) or (n_in_p != n_in) or (x.dtype != compute_dtype):
        xp = jnp.zeros((b_p, n_in_p), compute_dtype).at[:B, :n_in].set(
            x.astype(compute_dtype))
    else:
        xp = x

    const_kw = dict(pipeline_mode=pl.Buffered(1)) if single_buf else {}

    w2_reads = grid_b if tiled else 1
    cost = pl.CostEstimate(
        flops=2 * b_p * (n_in_p * nh_p + nh_p * no_p),
        transcendentals=b_p * nh_p,
        bytes_accessed=(b_p * n_in_p * itemsize            # x stream in
                        + n_in_p * nh_p * itemsize         # W1 (resident)
                        + w2_reads * nh_p * no_p * itemsize  # W2
                        + (nh_p + no_p) * 4                # biases
                        + b_p * no_p * out_itemsize),      # output stream
    )

    if not tiled:
        kernel = functools.partial(mlp_kernel_resident, bf16_act=bf16_act)
        grid_spec = pltpu.PrefetchScalarGridSpec(
            num_scalar_prefetch=0,
            grid=(grid_b,),
            in_specs=[
                # x tile streams along the batch grid axis.
                pl.BlockSpec((tb, n_in_p), lambda i: (i, 0)),
                # Weights/biases: constant index -> VMEM-resident,
                # single-buffered when supported.
                pl.BlockSpec((n_in_p, nh_p), lambda i: (0, 0), **const_kw),
                pl.BlockSpec((1, nh_p), lambda i: (0, 0), **const_kw),
                pl.BlockSpec((nh_p, no_p), lambda i: (0, 0), **const_kw),
                pl.BlockSpec((1, no_p), lambda i: (0, 0), **const_kw),
            ],
            out_specs=pl.BlockSpec((tb, no_p), lambda i: (i, 0)),
        )
        dim_sem = ("parallel",)
    else:
        kernel = functools.partial(mlp_kernel_tiled_nout, bf16_act=bf16_act)
        grid_spec = pltpu.PrefetchScalarGridSpec(
            num_scalar_prefetch=0,
            grid=(grid_b, grid_n),
            in_specs=[
                pl.BlockSpec((tb, n_in_p), lambda i, j: (i, 0)),
                pl.BlockSpec((n_in_p, nh_p), lambda i, j: (0, 0), **const_kw),
                pl.BlockSpec((1, nh_p), lambda i, j: (0, 0), **const_kw),
                # W2 / b2 stream along the n_out grid axis.
                pl.BlockSpec((nh_p, tn), lambda i, j: (0, j)),
                pl.BlockSpec((1, tn), lambda i, j: (0, j)),
            ],
            out_specs=pl.BlockSpec((tb, tn), lambda i, j: (i, j)),
            scratch_shapes=[pltpu.VMEM((tb, nh_p), compute_dtype)],
        )
        dim_sem = ("parallel", "arbitrary")

    out_p = pl.pallas_call(
        kernel,
        out_shape=jax.ShapeDtypeStruct((b_p, no_p), out_dtype),
        grid_spec=grid_spec,
        compiler_params=pltpu.CompilerParams(
            dimension_semantics=dim_sem,
            vmem_limit_bytes=32 * 1024 * 1024),
        cost_estimate=cost,
    )(xp, w1p, b1p, w2p, b2p)

    # Strip batch and lane padding.
    return out_p[:B, :n_out]


def init_params(key, n_in, n_hidden, n_out):
    """Deterministic init matching torch.nn.Linear's U(-1/sqrt(fan_in), +)."""
    k1, k2, k3, k4 = jax.random.split(key, 4)
    bound1 = 1.0 / jnp.sqrt(n_in)
    bound2 = 1.0 / jnp.sqrt(n_hidden)
    w1 = jax.random.uniform(k1, (n_in, n_hidden), jnp.float32, -bound1, bound1)
    b1 = jax.random.uniform(k2, (n_hidden,), jnp.float32, -bound1, bound1)
    w2 = jax.random.uniform(k3, (n_hidden, n_out), jnp.float32, -bound2, bound2)
    b2 = jax.random.uniform(k4, (n_out,), jnp.float32, -bound2, bound2)
    return w1, b1, w2, b2


# TODO(synk): my_train (SGD/MSE training loop) and call_numpy are host-side
# helpers with no Pallas equivalent; only forward() is implemented here.

if __name__ == "__main__":
    key = jax.random.PRNGKey(0)

    # ---- config A: small shapes, f32 path (tight tolerance) ---------------
    B, n_in, n_hidden, n_out = 8, 16, 32, 4
    kx, kp = jax.random.split(key)
    x = jax.random.normal(kx, (B, n_in), jnp.float32)
    w1, b1, w2, b2 = init_params(kp, n_in, n_hidden, n_out)
    ref = jnp.tanh(x @ w1 + b1) @ w2 + b2

    params_f32, _ = prepare_params(w1, b1, w2, b2)          # pad/cast ONCE
    out_f32 = jax.block_until_ready(net_forward(x, *params_f32, n_out=n_out))
    assert out_f32.shape == (B, n_out)
    assert jnp.allclose(out_f32, ref, atol=1e-5, rtol=1e-5)

    # ---- config B: bf16 operands + bf16 output (v6e/v7x MXU/EUP path) -----
    params_bf16, _ = prepare_params(w1, b1, w2, b2, compute_dtype=jnp.bfloat16)
    out_bf16 = jax.block_until_ready(
        net_forward(x, *params_bf16, n_out=n_out, out_dtype=jnp.bfloat16))
    assert out_bf16.shape == (B, n_out)
    assert jnp.allclose(out_bf16.astype(jnp.float32), ref, atol=5e-2, rtol=5e-2)

    # ---- config C: force the n_out-tiled scalability path ------------------
    B2, n_in2, n_hid2, n_out2 = 64, 128, 200, 300
    kx2, kp2 = jax.random.split(jax.random.PRNGKey(1))
    x2 = jax.random.normal(kx2, (B2, n_in2), jnp.float32)
    w1b, b1b, w2b, b2b = init_params(kp2, n_in2, n_hid2, n_out2)
    ref2 = jnp.tanh(x2 @ w1b + b1b) @ w2b + b2b
    params2, _ = prepare_params(w1b, b1b, w2b, b2b)
    out2 = jax.block_until_ready(
        net_forward(x2, *params2, n_out=n_out2, block_n=128))
    assert out2.shape == (B2, n_out2)
    assert jnp.allclose(out2, ref2, atol=5e-4, rtol=5e-4)

    print("KERNEL_OK")
</pallas_src>

<mosaic_0001>
module attributes {stable_mosaic.version = 11 : i64} {
  func.func @mlp_kernel_resident(%arg0: i32, %arg1: memref<16x16xf32, #tpu.memory_space<vmem>>, %arg2: memref<16x128xf32, #tpu.memory_space<vmem>>, %arg3: memref<1x128xf32, #tpu.memory_space<vmem>>, %arg4: memref<128x128xf32, #tpu.memory_space<vmem>>, %arg5: memref<1x128xf32, #tpu.memory_space<vmem>>, %arg6: memref<16x128xf32, #tpu.memory_space<vmem>>) attributes {dimension_semantics = [#tpu.dimension_semantics<parallel>], iteration_bounds = array<i64: 1>, scalar_prefetch = 0 : i64, scratch_operands = 0 : i64, tpu.core_type = #tpu.core_type<tc>, window_params = [{transform_indices = @transform_0, window_bounds = array<i64: 16, 16>}, {pipeline_mode = #tpu.pipeline_mode<synchronous>, transform_indices = @transform_1, window_bounds = array<i64: 16, 128>}, {pipeline_mode = #tpu.pipeline_mode<synchronous>, transform_indices = @transform_2, window_bounds = array<i64: 1, 128>}, {pipeline_mode = #tpu.pipeline_mode<synchronous>, transform_indices = @transform_3, window_bounds = array<i64: 128, 128>}, {pipeline_mode = #tpu.pipeline_mode<synchronous>, transform_indices = @transform_4, window_bounds = array<i64: 1, 128>}, {transform_indices = @transform_5, window_bounds = array<i64: 16, 128>}]} {
    %c0 = arith.constant 0 : index
    %c0_0 = arith.constant 0 : index
    %0 = vector.load %arg1[%c0, %c0_0] : memref<16x16xf32, #tpu.memory_space<vmem>>, vector<16x16xf32>
    %c0_1 = arith.constant 0 : index
    %c0_2 = arith.constant 0 : index
    %1 = vector.load %arg2[%c0_1, %c0_2] : memref<16x128xf32, #tpu.memory_space<vmem>>, vector<16x128xf32>
    %cst = arith.constant dense<0.000000e+00> : vector<16x128xf32>
    %2 = tpu.matmul %0, %1, %cst {dimension_numbers = #tpu.dot_dimension_numbers<[1], [0], [0], [1], [0, 0, 1, 1], [], []>} : vector<16x16xf32>, vector<16x128xf32>, vector<16x128xf32> -> vector<16x128xf32>
    %c0_3 = arith.constant 0 : index
    %c0_4 = arith.constant 0 : index
    %3 = vector.load %arg3[%c0_3, %c0_4] : memref<1x128xf32, #tpu.memory_space<vmem>>, vector<1x128xf32>
    %4 = vector.broadcast %3 : vector<1x128xf32> to vector<16x128xf32>
    %5 = arith.addf %2, %4 : vector<16x128xf32>
    %6 = math.tanh %5 : vector<16x128xf32>
    %c0_5 = arith.constant 0 : index
    %c0_6 = arith.constant 0 : index
    %7 = vector.load %arg4[%c0_5, %c0_6] : memref<128x128xf32, #tpu.memory_space<vmem>>, vector<128x128xf32>
    %cst_7 = arith.constant dense<0.000000e+00> : vector<16x128xf32>
    %8 = tpu.matmul %6, %7, %cst_7 {dimension_numbers = #tpu.dot_dimension_numbers<[1], [0], [0], [1], [0, 0, 1, 1], [], []>} : vector<16x128xf32>, vector<128x128xf32>, vector<16x128xf32> -> vector<16x128xf32>
    %c0_8 = arith.constant 0 : index
    %c0_9 = arith.constant 0 : index
    %9 = vector.load %arg5[%c0_8, %c0_9] : memref<1x128xf32, #tpu.memory_space<vmem>>, vector<1x128xf32>
    %10 = vector.broadcast %9 : vector<1x128xf32> to vector<16x128xf32>
    %11 = arith.addf %8, %10 : vector<16x128xf32>
    %c0_10 = arith.constant 0 : index
    %c0_11 = arith.constant 0 : index
    %12 = vector.load %arg6[%c0_10, %c0_11] : memref<16x128xf32, #tpu.memory_space<vmem>>, vector<16x128xf32>
    tpu.vector_store %arg6[%c0_10, %c0_11], %11 {strides = array<i32>} : memref<16x128xf32, #tpu.memory_space<vmem>>, vector<16x128xf32>,
    return
  }
  func.func @transform_0(%arg0: i32) -> (i32, i32) {
    %c0_i32 = arith.constant 0 : i32
    %c0_i32_0 = arith.constant 0 : i32
    return %arg0, %c0_i32 : i32, i32
  }
  func.func @transform_1(%arg0: i32) -> (i32, i32) {
    %c0_i32 = arith.constant 0 : i32
    %c0_i32_0 = arith.constant 0 : i32
    %c0_i32_1 = arith.constant 0 : i32
    return %c0_i32, %c0_i32_0 : i32, i32
  }
  func.func @transform_2(%arg0: i32) -> (i32, i32) {
    %c0_i32 = arith.constant 0 : i32
    %c0_i32_0 = arith.constant 0 : i32
    %c0_i32_1 = arith.constant 0 : i32
    return %c0_i32, %c0_i32_0 : i32, i32
  }
  func.func @transform_3(%arg0: i32) -> (i32, i32) {
    %c0_i32 = arith.constant 0 : i32
    %c0_i32_0 = arith.constant 0 : i32
    %c0_i32_1 = arith.constant 0 : i32
    return %c0_i32, %c0_i32_0 : i32, i32
  }
  func.func @transform_4(%arg0: i32) -> (i32, i32) {
    %c0_i32 = arith.constant 0 : i32
    %c0_i32_0 = arith.constant 0 : i32
    %c0_i32_1 = arith.constant 0 : i32
    return %c0_i32, %c0_i32_0 : i32, i32
  }
  func.func @transform_5(%arg0: i32) -> (i32, i32) {
    %c0_i32 = arith.constant 0 : i32
    %c0_i32_0 = arith.constant 0 : i32
    return %arg0, %c0_i32 : i32, i32
  }
}

</mosaic_0001>

<llo_original>
// kernel: net_forward.1
$region0: #{net_forward.1}
  #allocation0 [shape = 'u32[]', space=smem, size = 0x4, offset = 0x4, fixed_abs, tag = 'smem constant byte address 0x4 - core index']
  #allocation1 [shape = 'u32[144,128]{1,0:T(1,128)}', space=vmem, size = 0x12000, scoped, tag = 'internal scratch']
  %s0 = inlined_call_operand.vmem [shape: f32[16,16], index: 0, kind: input, shape index: {}]
  %s1 = inlined_call_operand.vmem [shape: f32[16,128], index: 1, kind: input, shape index: {}]
  %s2 = inlined_call_operand.vmem [shape: f32[1,128], index: 2, kind: input, shape index: {}]
  %s3 = inlined_call_operand.hbm [shape: f32[128,128], index: 3, kind: input, shape index: {}]
  %s4 = inlined_call_operand.vmem [shape: f32[1,128], index: 4, kind: input, shape index: {}]
  %s5 = inlined_call_operand.vmem [shape: f32[16,128], index: 5, kind: output, shape index: {}]
  %s6 = sld [smem:[#allocation0]]
  $region34: #{net_forward.1} parent=0
    _
  %s8 = ssub.s32 1, %s6
  %s9 = scalar_select 0, %s8, %s6
  $region1: #{net_forward.1} parent=0
    #allocation2 [shape = 'u8[65536]{0}', space=vmem, size = 0x10000, scoped, tag = 'input window, operand 3, single buffered']
    #allocation3 [shape = 's32[1]{0}', space=sflag, size = 0x4, scoped, tag = 'scoped memory for net_forward.1']
    %10 = vsyncpa [#allocation3], 0
    // Predicated region
    $region2: #{net_forward.1} parent=1 // pred_check
      _
    $region3: #{net_forward.1} parent=1 // pred_check_branch
      %12 = sbr.rel (0) target = $region5
    $region4: #{net_forward.1} parent=1 // pred_region
      _
    $region5: #{net_forward.1} parent=1 // pred_fallthru
      _
    // Predicated region
    $region6: #{net_forward.1} parent=1 // pred_check
      _
    $region7: #{net_forward.1} parent=1 // pred_check_branch
      %14 = sbr.rel (0) target = $region9
    $region8: #{net_forward.1} parent=1 // pred_region
      _
    $region9: #{net_forward.1} parent=1 // pred_fallthru
      _
    // Predicated region
    $region10: #{net_forward.1} parent=1 // pred_check
      _
    $region11: #{net_forward.1} parent=1 // pred_check_branch
      %16 = sbr.rel (0) target = $region13
    $region12: #{net_forward.1} parent=1 // pred_region
      _
    $region13: #{net_forward.1} parent=1 // pred_fallthru
      _
    // Predicated region
    $region14: #{net_forward.1} parent=1 // pred_check
      _
    $region15: #{net_forward.1} parent=1 // pred_check_branch
      %18 = sbr.rel (0) target = $region17
    $region16: #{net_forward.1} parent=1 // pred_region
      %s20 = ssub.s32 2048, 2048
      %21 = vsyncadd [#allocation3], %s20
      %s22 = sshll.u32 [#allocation2], 4
      %s23 = int_to_ptr.vmem [resolvable:$true] %s22
      %28 = dma.hbm_to_vmem [thread:$0]  %s3, 2048, %s23, [#allocation3], 128, 128, 8
    $region17: #{net_forward.1} parent=1 // pred_fallthru
      _
    // Predicated region
    $region18: #{net_forward.1} parent=1 // pred_check
      _
    $region19: #{net_forward.1} parent=1 // pred_check_branch
      %30 = sbr.rel (0) target = $region21
    $region20: #{net_forward.1} parent=1 // pred_region
      _
    $region21: #{net_forward.1} parent=1 // pred_fallthru
      _
    // Predicated region
    $region22: #{net_forward.1} parent=1 // pred_check
      _
    $region23: #{net_forward.1} parent=1 // pred_check_branch
      %32 = sbr.rel (0) target = $region25
    $region24: #{net_forward.1} parent=1 // pred_region
      %33 = dma.done [#allocation3], 2048
    $region25: #{net_forward.1} parent=1 // pred_fallthru
      _
    %v34 = vld [vmem:[%s0] sm:$0xff]
    %v35 = vld [vmem:[%s0 + $0x8] sm:$0xff]
    %v36 = vld [vmem:[%s1] sm:$0xff]
    %v37 = vld [vmem:[%s1 + $0x8] sm:$0xff]
    %v38 = vld [vmem:[%s2] sm:$0x1]
    %v40 = vlaneseq
    %v41 = vshrl.u32 %v40, 7
    %v42 = vsub.s32 0, %v41
    %v43 = vrot.slane %v38, %v42
    %vm45 = vcmask 130048
    %v47 = vsel %vm45, %v34, 0
    %v50 = vsel %vm45, %v35, 0
    %52 = vmatprep.subr.mxu0 0.0
    %53 = vmatpush1.msra.mxu0 %v36
    %54 = vmatprep.subr.mxu0 0.0
    %55 = vmatpush1.msra.mxu0 %v37
    %56 = vmatprep.subr.mxu0 0.0
    %57 = vmatpush1.msra.mxu0 0.0
    %58 = vmatprep.subr.mxu0 0.0
    %59 = vmatpush1.msra.mxu0 0.0
    %60 = vmatprep.subr.mxu0 0.0
    %61 = vmatpush1.msra.mxu0 0.0
    %62 = vmatprep.subr.mxu0 0.0
    %63 = vmatpush1.msra.mxu0 0.0
    %64 = vmatprep.subr.mxu0 0.0
    %65 = vmatpush1.msra.mxu0 0.0
    %66 = vmatprep.subr.mxu0 0.0
    %67 = vmatpush1.msra.mxu0 0.0
    %68 = vmatprep.subr.mxu0 0.0
    %69 = vmatpush1.msra.mxu0 0.0
    %70 = vmatprep.subr.mxu0 0.0
    %71 = vmatpush1.msra.mxu0 0.0
    %72 = vmatprep.subr.mxu0 0.0
    %73 = vmatpush1.msra.mxu0 0.0
    %74 = vmatprep.subr.mxu0 0.0
    %75 = vmatpush1.msra.mxu0 0.0
    %76 = vmatprep.subr.mxu0 0.0
    %77 = vmatpush1.msra.mxu0 0.0
    %78 = vmatprep.subr.mxu0 0.0
    %79 = vmatpush1.msra.mxu0 0.0
    %80 = vmatprep.subr.mxu0 0.0
    %81 = vmatpush1.msra.mxu0 0.0
    %82 = vmatprep.subr.mxu0 0.0
    %83 = vmatpush1.msra.mxu0 0.0
    %84 = vmatprep.subr.mxu0 0.0
    %85 = vmatpush1.msra.mxu0 0.0
    %86 = vmatprep.subr.mxu0 0.0
    %87 = vmatpush1.msra.mxu0 0.0
    %88 = vmatprep.subr.mxu0 0.0
    %89 = vmatpush1.msra.mxu0 0.0
    %90 = vmatprep.subr.mxu0 0.0
    %91 = vmatpush1.msra.mxu0 0.0
    %92 = vmatprep.subr.mxu0 0.0
    %93 = vmatpush1.msra.mxu0 0.0
    %94 = vmatprep.subr.mxu0 0.0
    %95 = vmatpush1.msra.mxu0 0.0
    %96 = vmatprep.subr.mxu0 0.0
    %97 = vmatpush1.msra.mxu0 0.0
    %98 = vmatprep.subr.mxu0 0.0
    %99 = vmatpush1.msra.mxu0 0.0
    %100 = vmatprep.subr.mxu0 0.0
    %101 = vmatpush1.msra.mxu0 0.0
    %102 = vmatprep.subr.mxu0 0.0
    %103 = vmatpush1.msra.mxu0 0.0
    %104 = vmatprep.subr.mxu0 0.0
    %105 = vmatpush1.msra.mxu0 0.0
    %106 = vmatprep.subr.mxu0 0.0
    %107 = vmatpush1.msra.mxu0 0.0
    %108 = vmatprep.subr.mxu0 0.0
    %109 = vmatpush1.msra.mxu0 0.0
    %110 = vmatprep.subr.mxu0 0.0
    %111 = vmatpush1.msra.mxu0 0.0
    %112 = vmatprep.subr.mxu0 0.0
    %113 = vmatpush1.msra.mxu0 0.0
    %114 = vmatprep.subr.mxu0 0.0
    %115 = vmatpush1.msra.mxu0 0.0
    %116 = vmatprep.mubr.f32.mxu0 0.0
    %117 = vmatmul.mubr.f32.gmra.mrb[0].mxu0 %v47
    %v118 = vpop.f32.mrb[0].mxu0
    %v119 = vadd.f32 %v43, %v118
    %v120 = vpop.f32.mrb[0].mxu0
    %121 = vmatprep.mubr.f32.mxu0 0.0
    %122 = vmatmul.mubr.f32.gmra.mrb[0].mxu0 %v50
    %v123 = vpop.f32.mrb[0].mxu0
    %v124 = vadd.f32 %v43, %v123
    %v125 = vpop.f32.mrb[0].mxu0
    %126 = vdwg.mxu0
    %v127 = vtanh.pop %v119
    %v128 = vtanh.pop %v124
    %v129 = vld [vmem:[#allocation2] sm:$0xff]
    %v130 = vld [vmem:[#allocation2 + $0x8] sm:$0xff]
    %v131 = vld [vmem:[#allocation2 + $0x10] sm:$0xff]
    %v132 = vld [vmem:[#allocation2 + $0x18] sm:$0xff]
    %v133 = vld [vmem:[#allocation2 + $0x20] sm:$0xff]
    %v134 = vld [vmem:[#allocation2 + $0x28] sm:$0xff]
    %v135 = vld [vmem:[#allocation2 + $0x30] sm:$0xff]
    %v136 = vld [vmem:[#allocation2 + $0x38] sm:$0xff]
    %v137 = vld [vmem:[#allocation2 + $0x40] sm:$0xff]
    %v138 = vld [vmem:[#allocation2 + $0x48] sm:$0xff]
    %v139 = vld [vmem:[#allocation2 + $0x50] sm:$0xff]
    %v140 = vld [vmem:[#allocation2 + $0x58] sm:$0xff]
    %v141 = vld [vmem:[#allocation2 + $0x60] sm:$0xff]
    %v142 = vld [vmem:[#allocation2 + $0x68] sm:$0xff]
    %v143 = vld [vmem:[#allocation2 + $0x70] sm:$0xff]
    %v144 = vld [vmem:[#allocation2 + $0x78] sm:$0xff]
    %v145 = vld [vmem:[%s4] sm:$0x1]
    %v147 = vlaneseq
    %v148 = vshrl.u32 %v147, 7
    %v149 = vsub.s32 0, %v148
    %v150 = vrot.slane %v145, %v149
    %152 = vmatprep.subr.mxu0 0.0
    %153 = vmatpush1.msra.mxu0 %v129
    %154 = vmatprep.subr.mxu0 0.0
    %155 = vmatpush1.msra.mxu0 %v130
    %156 = vmatprep.subr.mxu0 0.0
    %157 = vmatpush1.msra.mxu0 %v131
    %158 = vmatprep.subr.mxu0 0.0
    %159 = vmatpush1.msra.mxu0 %v132
    %160 = vmatprep.subr.mxu0 0.0
    %161 = vmatpush1.msra.mxu0 %v133
    %162 = vmatprep.subr.mxu0 0.0
    %163 = vmatpush1.msra.mxu0 %v134
    %164 = vmatprep.subr.mxu0 0.0
    %165 = vmatpush1.msra.mxu0 %v135
    %166 = vmatprep.subr.mxu0 0.0
    %167 = vmatpush1.msra.mxu0 %v136
    %168 = vmatprep.subr.mxu0 0.0
    %169 = vmatpush1.msra.mxu0 %v137
    %170 = vmatprep.subr.mxu0 0.0
    %171 = vmatpush1.msra.mxu0 %v138
    %172 = vmatprep.subr.mxu0 0.0
    %173 = vmatpush1.msra.mxu0 %v139
    %174 = vmatprep.subr.mxu0 0.0
    %175 = vmatpush1.msra.mxu0 %v140
    %176 = vmatprep.subr.mxu0 0.0
    %177 = vmatpush1.msra.mxu0 %v141
    %178 = vmatprep.subr.mxu0 0.0
    %179 = vmatpush1.msra.mxu0 %v142
    %180 = vmatprep.subr.mxu0 0.0
    %181 = vmatpush1.msra.mxu0 %v143
    %182 = vmatprep.subr.mxu0 0.0
    %183 = vmatpush1.msra.mxu0 %v144
    %184 = vmatprep.subr.mxu0 0.0
    %185 = vmatpush1.msra.mxu0 0.0
    %186 = vmatprep.subr.mxu0 0.0
    %187 = vmatpush1.msra.mxu0 0.0
    %188 = vmatprep.subr.mxu0 0.0
    %189 = vmatpush1.msra.mxu0 0.0
    %190 = vmatprep.subr.mxu0 0.0
    %191 = vmatpush1.msra.mxu0 0.0
    %192 = vmatprep.subr.mxu0 0.0
    %193 = vmatpush1.msra.mxu0 0.0
    %194 = vmatprep.subr.mxu0 0.0
    %195 = vmatpush1.msra.mxu0 0.0
    %196 = vmatprep.subr.mxu0 0.0
    %197 = vmatpush1.msra.mxu0 0.0
    %198 = vmatprep.subr.mxu0 0.0
    %199 = vmatpush1.msra.mxu0 0.0
    %200 = vmatprep.subr.mxu0 0.0
    %201 = vmatpush1.msra.mxu0 0.0
    %202 = vmatprep.subr.mxu0 0.0
    %203 = vmatpush1.msra.mxu0 0.0
    %204 = vmatprep.subr.mxu0 0.0
    %205 = vmatpush1.msra.mxu0 0.0
    %206 = vmatprep.subr.mxu0 0.0
    %207 = vmatpush1.msra.mxu0 0.0
    %208 = vmatprep.subr.mxu0 0.0
    %209 = vmatpush1.msra.mxu0 0.0
    %210 = vmatprep.subr.mxu0 0.0
    %211 = vmatpush1.msra.mxu0 0.0
    %212 = vmatprep.subr.mxu0 0.0
    %213 = vmatpush1.msra.mxu0 0.0
    %214 = vmatprep.subr.mxu0 0.0
    %215 = vmatpush1.msra.mxu0 0.0
    %216 = vmatprep.mubr.f32.mxu0 0.0
    %217 = vmatmul.mubr.f32.gmra.mrb[0].mxu0 %v127
    %v218 = vpop.f32.mrb[0].mxu0
    %v219 = vadd.f32 %v150, %v218
    %v220 = vpop.f32.mrb[0].mxu0
    %221 = vmatprep.mubr.f32.mxu0 0.0
    %222 = vmatmul.mubr.f32.gmra.mrb[0].mxu0 %v128
    %v223 = vpop.f32.mrb[0].mxu0
    %v224 = vadd.f32 %v150, %v223
    %v225 = vpop.f32.mrb[0].mxu0
    %226 = vdwg.mxu0
    %227 = vst [vmem:[%s5] sm:$0xff] %v219
    %228 = vst [vmem:[%s5 + $0x8] sm:$0xff] %v224
    // Predicated region
    $region26: #{net_forward.1} parent=1 // pred_check
      _
    $region27: #{net_forward.1} parent=1 // pred_check_branch
      %230 = sbr.rel (0) target = $region29
    $region28: #{net_forward.1} parent=1 // pred_region
      _
    $region29: #{net_forward.1} parent=1 // pred_fallthru
      _
    // Predicated region
    $region30: #{net_forward.1} parent=1 // pred_check
      _
    $region31: #{net_forward.1} parent=1 // pred_check_branch
      %232 = sbr.rel (0) target = $region33
    $region32: #{net_forward.1} parent=1 // pred_region
      _
    $region33: #{net_forward.1} parent=1 // pred_fallthru
      _
    %233 = vsyncpa [#allocation3], 1

</llo_original>
